<compile_context>
chip_gen: v7x
topology: tpu7x:2x2x1
jax: 0.10.0
libtpu: 0.0.40
codegen_flags: <defaults>
</compile_context>

<pallas_src>
from functools import partial

import jax
import jax.numpy as jnp
from jax.experimental import pallas as pl
from jax.experimental.pallas import tpu as pltpu


_LANE = 128
_SUBLANE = 8
_MAX_COLS = 4096
# Keep (inputs + output) x 2 double-buffers under ~12 MiB so we fit every
# generation's scoped-VMEM default (16 MiB on v5e, 32 MiB on v6e/v7x) with
# headroom; tiles this size already sit at ~85%+ of the HBM roofline.
_VMEM_BUDGET_BYTES = 12 * 1024 * 1024


def _round_up(x: int, m: int) -> int:
    return ((x + m - 1) // m) * m


def _slab_layout(n: int, itemsize: int, num_arrays: int):
    """Pick a lane-dense (rows, cols) slab, row-tile size and 1-D grid for n elems."""
    # Lane-dense columns: grow in powers of two up to 4096 lanes, but keep at
    # least 16 rows so the grid can have >= 2 parallel steps (v7x megacore).
    cols = _LANE
    while cols * 2 <= _MAX_COLS and n >= (cols * 2) * (2 * _SUBLANE):
        cols *= 2
    rows = max(1, pl.cdiv(n, cols))
    rows8 = _round_up(rows, _SUBLANE)

    # Row tile: largest multiple of 8 whose double-buffered footprint fits.
    bufs = 2 * num_arrays
    tr_cap = max(
        _SUBLANE,
        (_VMEM_BUDGET_BYTES // (bufs * cols * itemsize)) // _SUBLANE * _SUBLANE,
    )
    if rows8 >= 2 * _SUBLANE:
        # Enough rows for >= 2 grid steps: split at least in half.
        tr = min(tr_cap, _round_up(pl.cdiv(rows8, 2), _SUBLANE))
    else:
        tr = _SUBLANE
    grid = pl.cdiv(rows8, tr)
    rows_final = grid * tr
    return rows_final, cols, tr, grid


@partial(jax.jit, static_argnums=0)
def _elementwise_call(kernel, *arrays):
    """Apply an elementwise Pallas kernel to same-shaped arrays of any shape.

    Arrays are flattened, padded (with 1.0 — safe for exp/log/softplus and its
    inverse), and presented as a lane-dense 2D slab processed by a 1-D
    'parallel' grid of large (tr, cols) blocks. Layout plumbing happens in the
    (jitted) wrapper; the kernel only sees wide, unmasked loads/stores.
    """
    x0 = arrays[0]
    orig_shape = x0.shape
    dtype = x0.dtype
    n = max(1, int(x0.size))
    itemsize = jnp.dtype(dtype).itemsize
    rows, cols, tr, grid = _slab_layout(n, itemsize, num_arrays=len(arrays) + 1)
    total = rows * cols

    def to_slab(a):
        flat = jnp.asarray(a, dtype=dtype).reshape(-1)
        pad = total - flat.shape[0]
        if pad:
            flat = jnp.pad(flat, (0, pad), constant_values=1.0)
        return flat.reshape(rows, cols)

    slabs = [to_slab(a) for a in arrays]
    block = pl.BlockSpec((tr, cols), lambda i: (i, 0))

    out = pl.pallas_call(
        kernel,
        out_shape=jax.ShapeDtypeStruct((rows, cols), dtype),
        grid=(grid,),
        in_specs=[block] * len(arrays),
        out_specs=block,
        compiler_params=pltpu.CompilerParams(
            dimension_semantics=("parallel",)),
    )(*slabs)

    return out.reshape(-1)[: int(x0.size)].reshape(orig_shape)


# ---------------------------------------------------------------------------
# Elementwise Pallas kernels (VPU/EUP work: exp / log / softplus)
# ---------------------------------------------------------------------------

def _sigma_from_log_kernel(p_ref, o_ref):
    # sigma = exp(log_sigma)
    o_ref[...] = jnp.exp(p_ref[...])


def _log_from_sigma_kernel(s_ref, o_ref):
    # log_sigma = log(sigma)
    o_ref[...] = jnp.log(s_ref[...])


def _sigma_from_rho_kernel(p_ref, o_ref):
    # sigma = softplus(rho); stable: max(x,0) + log1p(exp(-|x|))
    x = p_ref[...]
    o_ref[...] = jnp.maximum(x, 0.0) + jnp.log1p(jnp.exp(-jnp.abs(x)))


def _rho_from_sigma_kernel(s_ref, o_ref):
    # rho = softplus^-1(sigma); stable: s + log(-expm1(-s))
    s = s_ref[...]
    o_ref[...] = s + jnp.log(-jnp.expm1(-s))


# Fused reparameterization: w = mu + sigma(param) * eps. Avoids the extra HBM
# round trip of the sigma tensor — the exp/softplus lands on the otherwise
# idle EUP slot while the kernel streams mu/param/eps.
def _reparam_log_kernel(mu_ref, p_ref, eps_ref, o_ref):
    o_ref[...] = mu_ref[...] + jnp.exp(p_ref[...]) * eps_ref[...]


def _reparam_rho_kernel(mu_ref, p_ref, eps_ref, o_ref):
    x = p_ref[...]
    sigma = jnp.maximum(x, 0.0) + jnp.log1p(jnp.exp(-jnp.abs(x)))
    o_ref[...] = mu_ref[...] + sigma * eps_ref[...]


# ---------------------------------------------------------------------------
# Public functional API mirroring vartorch's helpers
# ---------------------------------------------------------------------------

def sigma_from_log(p):
    return _elementwise_call(_sigma_from_log_kernel, p)


def log_from_sigma(s):
    return _elementwise_call(_log_from_sigma_kernel, s)


def sigma_from_rho(p):
    return _elementwise_call(_sigma_from_rho_kernel, p)


def rho_from_sigma(s):
    return _elementwise_call(_rho_from_sigma_kernel, s)


def reparam_sample(mu, param, eps, param_mode: str = "log"):
    """Fused w = mu + sigma(param) * eps (the typical consumer of sigma)."""
    if param_mode == "log":
        return _elementwise_call(_reparam_log_kernel, mu, param, eps)
    elif param_mode == "rho":
        return _elementwise_call(_reparam_rho_kernel, mu, param, eps)
    raise ValueError(f"Unknown parametrization: {param_mode}")


# ---------------------------------------------------------------------------
# JAX-side equivalent of the VarLayer base class
# ---------------------------------------------------------------------------

class VarLayer:
    """Variational layer base class (Pallas/JAX port of vartorch VarLayer)."""

    def __init__(self, param_mode: str = "log") -> None:
        self.parametrization = param_mode
        self.sampling = True

    def forward(self, x):
        raise NotImplementedError  # abstract in the reference module

    # --- parametrization property ---
    @property
    def parametrization(self) -> str:
        return self._parametrization

    @parametrization.setter
    def parametrization(self, param_mode: str) -> None:
        if param_mode in ("log", "rho"):
            self._parametrization = param_mode
        else:
            raise ValueError(f"Unknown parametrization: {param_mode}")
        if param_mode == "log":
            self.sigma = sigma_from_log
            self.sigma_inverse = log_from_sigma
        else:  # 'rho'
            self.sigma = sigma_from_rho
            self.sigma_inverse = rho_from_sigma

    # --- sampling property ---
    @property
    def sampling(self) -> bool:
        return self._sampling

    @sampling.setter
    def sampling(self, sample_mode: bool) -> None:
        self._sampling = sample_mode


# ---------------------------------------------------------------------------
# Demo / self-test
# ---------------------------------------------------------------------------

if __name__ == "__main__":
    key = jax.random.PRNGKey(0)
    k1, k2, k3, k4, k5 = jax.random.split(key, 5)

    # Synthetic variational parameters of a 16x256 variational linear layer.
    rows, cols = 16, 256
    log_param = 0.1 * jax.random.normal(k1, (rows, cols), dtype=jnp.float32) - 2.0
    rho_param = jax.random.normal(k2, (rows, cols), dtype=jnp.float32)
    mu = 0.05 * jax.random.normal(k3, (rows, cols), dtype=jnp.float32)
    eps = jax.random.normal(k4, (rows, cols), dtype=jnp.float32)
    # Odd-shaped 1-D bias parameter (exercises the pad/reshape path).
    bias_rho = jax.random.normal(k5, (37,), dtype=jnp.float32)

    # 'log' parametrization
    layer_log = VarLayer(param_mode="log")
    sigma_log = jax.block_until_ready(layer_log.sigma(log_param))
    log_back = jax.block_until_ready(layer_log.sigma_inverse(sigma_log))

    # 'rho' parametrization
    layer_rho = VarLayer(param_mode="rho")
    sigma_rho = jax.block_until_ready(layer_rho.sigma(rho_param))
    rho_back = jax.block_until_ready(layer_rho.sigma_inverse(sigma_rho))

    # Odd-shape bias sigma
    sigma_bias = jax.block_until_ready(sigma_from_rho(bias_rho))

    # Fused reparameterization
    w_log = jax.block_until_ready(reparam_sample(mu, log_param, eps, "log"))
    w_rho = jax.block_until_ready(reparam_sample(mu, rho_param, eps, "rho"))

    # Reference checks against plain JAX semantics (matching vartorch).
    ref_sigma_log = jnp.exp(log_param)
    ref_sigma_rho = jax.nn.softplus(rho_param)
    ref_sigma_bias = jax.nn.softplus(bias_rho)
    ref_w_log = mu + ref_sigma_log * eps
    ref_w_rho = mu + ref_sigma_rho * eps

    assert jnp.all(sigma_log > 0) and jnp.all(sigma_rho > 0) and jnp.all(sigma_bias > 0)
    assert jnp.allclose(sigma_log, ref_sigma_log, rtol=1e-5, atol=1e-6)
    assert jnp.allclose(sigma_rho, ref_sigma_rho, rtol=1e-5, atol=1e-6)
    assert jnp.allclose(sigma_bias, ref_sigma_bias, rtol=1e-5, atol=1e-6)
    assert jnp.allclose(log_back, log_param, rtol=1e-5, atol=1e-6)
    assert jnp.allclose(rho_back, rho_param, rtol=1e-5, atol=1e-5)
    assert jnp.allclose(w_log, ref_w_log, rtol=1e-5, atol=1e-6)
    assert jnp.allclose(w_rho, ref_w_rho, rtol=1e-5, atol=1e-6)

    print("KERNEL_OK")
</pallas_src>

<mosaic_0001>
module attributes {stable_mosaic.version = 11 : i64} {
  func.func @_sigma_from_log_kernel(%arg0: i32, %arg1: memref<8x256xf32, #tpu.memory_space<vmem>>, %arg2: memref<8x256xf32, #tpu.memory_space<vmem>>) attributes {dimension_semantics = [#tpu.dimension_semantics<parallel>], iteration_bounds = array<i64: 2>, scalar_prefetch = 0 : i64, scratch_operands = 0 : i64, tpu.core_type = #tpu.core_type<tc>, window_params = [{transform_indices = @transform_0, window_bounds = array<i64: 8, 256>}, {transform_indices = @transform_1, window_bounds = array<i64: 8, 256>}]} {
    %c0 = arith.constant 0 : index
    %c0_0 = arith.constant 0 : index
    %0 = vector.load %arg1[%c0, %c0_0] : memref<8x256xf32, #tpu.memory_space<vmem>>, vector<8x256xf32>
    %1 = math.exp %0 : vector<8x256xf32>
    %c0_1 = arith.constant 0 : index
    %c0_2 = arith.constant 0 : index
    %2 = vector.load %arg2[%c0_1, %c0_2] : memref<8x256xf32, #tpu.memory_space<vmem>>, vector<8x256xf32>
    tpu.vector_store %arg2[%c0_1, %c0_2], %1 {strides = array<i32>} : memref<8x256xf32, #tpu.memory_space<vmem>>, vector<8x256xf32>,
    return
  }
  func.func @transform_0(%arg0: i32) -> (i32, i32) {
    %c0_i32 = arith.constant 0 : i32
    %c0_i32_0 = arith.constant 0 : i32
    return %arg0, %c0_i32 : i32, i32
  }
  func.func @transform_1(%arg0: i32) -> (i32, i32) {
    %c0_i32 = arith.constant 0 : i32
    %c0_i32_0 = arith.constant 0 : i32
    return %arg0, %c0_i32 : i32, i32
  }
}

</mosaic_0001>

<llo_original>
// kernel: _elementwise_call.1
$region0: #{_elementwise_call.1}
  #allocation0 [shape = 'u32[]', space=smem, size = 0x4, offset = 0x4, fixed_abs, tag = 'smem constant byte address 0x4 - core index']
  #allocation1 [shape = 'u32[144,128]{1,0:T(1,128)}', space=vmem, size = 0x12000, scoped, tag = 'internal scratch']
  %s0 = inlined_call_operand.hbm [shape: f32[16,256], index: 0, kind: input, shape index: {}]
  %s1 = inlined_call_operand.hbm [shape: f32[16,256], index: 1, kind: output, shape index: {}]
  %s2 = sld [smem:[#allocation0]]
  $region41: #{_elementwise_call.1} parent=0
    _
  %s4 = ssub.s32 1, %s2
  %s5 = scalar_select 0, %s4, %s2
  $region1: #{_elementwise_call.1} parent=0
    #allocation2 [shape = 'u8[16384]{0}', space=vmem, size = 0x4000, scoped, tag = 'input window, operand 0']
    #allocation3 [shape = 's32[2]{0}', space=sflag, size = 0x8, scoped, tag = 'scoped memory for _elementwise_call.1']
    #allocation4 [shape = 's32[2]{0}', space=sflag, size = 0x8, scoped, tag = 'scoped memory for _elementwise_call.1']
    #allocation5 [shape = 'u8[16384]{0}', space=vmem, size = 0x4000, scoped, tag = 'output window, operand 0']
    %6 = vsyncpa [#allocation3], 0
    %s7 = scalar_lea.sflag [#allocation3], 1
    %8 = vsyncpa %s7, 0
    %9 = vsyncpa [#allocation4], 0
    %s10 = scalar_lea.sflag [#allocation4], 1
    %11 = vsyncpa %s10, 0
    loop: start=0, step=1, limit=4
    $region2: #{_elementwise_call.1} parent=1 // loop_pre_header
      _
    $region3: #{_elementwise_call.1} parent=1 // loop_header
      %s13 = sphi 0, %s17
      %p14 = scmp.ge.s32.totalorder %s13, 4
      %s23 = sphi 0, %s25
      %s26 = sphi 0, %s23
      %s27 = sphi 0, %s26
      %s43 = sphi 0, %s27
      %s49 = sphi 0, %s51
      %s52 = sphi 0, %s49
      %s53 = sphi 0, %s52
      %s69 = sphi 0, %s53
    $region4: #{_elementwise_call.1} parent=1 // loop_header_branch
      %16 = sbr.rel (%p14) target = $region8
    $region5: #{_elementwise_call.1} parent=1 // loop_body
      %s18 = ssub.s32 %s13, 1
      %s19 = ssub.s32 %s13, 2
      %s20 = sadd.s32 %s13, 1
      %s21 = ssub.s32 %s13, %s20
      %p22 = scmp.eq.s32.totalorder %s21, 0
      %s24 = sadd.s32 %s23, 1
      %s25 = scalar_select %p22, %s23, %s24
      %p28 = pneg %p22
      %p29 = scmp.eq.s32.totalorder %s13, 1
      %p30 = por %p28, %p29
      %p31 = scmp.ne.s32.totalorder %s23, %s26
      %p32 = scmp.eq.s32.totalorder %s13, 0
      %p33 = por %p31, %p32
      %p34 = scmp.ne.s32.totalorder %s23, %s26
      %p35 = scmp.eq.s32.totalorder %s18, 1
      %p36 = por %p34, %p35
      %p37 = scmp.ne.s32.totalorder %s26, %s27
      %p38 = scmp.eq.s32.totalorder %s18, 0
      %p39 = por %p37, %p38
      %p40 = scmp.ne.s32.totalorder %s26, %s27
      %p41 = scmp.eq.s32.totalorder %s19, 1
      %p42 = por %p40, %p41
      %p44 = scmp.ne.s32.totalorder %s27, %s43
      %p45 = scmp.eq.s32.totalorder %s19, 0
      %p46 = por %p44, %p45
      %s47 = ssub.s32 %s13, %s20
      %p48 = scmp.eq.s32.totalorder %s47, 0
      %s50 = sadd.s32 %s49, 1
      %s51 = scalar_select %p48, %s49, %s50
      %p54 = pneg %p48
      %p55 = scmp.eq.s32.totalorder %s13, 1
      %p56 = por %p54, %p55
      %p57 = scmp.ne.s32.totalorder %s49, %s52
      %p58 = scmp.eq.s32.totalorder %s13, 0
      %p59 = por %p57, %p58
      %p60 = scmp.ne.s32.totalorder %s49, %s52
      %p61 = scmp.eq.s32.totalorder %s18, 1
      %p62 = por %p60, %p61
      %p63 = scmp.ne.s32.totalorder %s52, %s53
      %p64 = scmp.eq.s32.totalorder %s18, 0
      %p65 = por %p63, %p64
      %p66 = scmp.ne.s32.totalorder %s52, %s53
      %p67 = scmp.eq.s32.totalorder %s19, 1
      %p68 = por %p66, %p67
      %p70 = scmp.ne.s32.totalorder %s53, %s69
      %p71 = scmp.eq.s32.totalorder %s19, 0
      %p72 = por %p70, %p71
      %p73 = scmp.le.s32.totalorder 1, %s13
      %p74 = scmp.lt.s32.totalorder %s13, 3
      %p75 = pnand %p73, %p74
      %p76 = pneg %p75
      // Predicated region
      $region9: #{_elementwise_call.1} parent=5 // pred_check
        _
      $region10: #{_elementwise_call.1} parent=5 // pred_check_branch
        %78 = sbr.rel (%p75) target = $region12
      $region11: #{_elementwise_call.1} parent=5 // pred_region
        %s79 = ssub.s32 %s13, 1
      $region12: #{_elementwise_call.1} parent=5 // pred_fallthru
        _
      %p80 = scmp.lt.s32.totalorder %s13, 2
      // Predicated region
      $region13: #{_elementwise_call.1} parent=5 // pred_check
        %p81 = pneg %p80
      $region14: #{_elementwise_call.1} parent=5 // pred_check_branch
        %83 = sbr.rel (%p81) target = $region16
      $region15: #{_elementwise_call.1} parent=5 // pred_region
        // Predicated region
        $region17: #{_elementwise_call.1} parent=15 // pred_check
          %p84 = pneg %p33
        $region18: #{_elementwise_call.1} parent=15 // pred_check_branch
          %86 = sbr.rel (%p84) target = $region20
        $region19: #{_elementwise_call.1} parent=15 // pred_region
          %s87 = sand.u32 %s23, 1
          %s88 = scalar_lea.sflag [#allocation3], %s87
          %s89 = sand.u32 %s23, 1
          %s90 = smul.addr %s89, 16
          %s91 = scalar_lea.vmem [#allocation2], %s90
          %s93 = ssub.s32 256, 256
          %94 = vsyncadd %s88, %s93
          %s95 = smul.addr %s13, 2
          %s96 = smul.addr %s95, 128
          %s97 = scalar_lea.hbm %s0, %s96
          %s99 = sshll.u32 %s91, 4
          %s100 = int_to_ptr.vmem [resolvable:$true] %s99
          %102 = dma.hbm_to_vmem [thread:$0]  %s97, 256, %s100, %s88
        $region20: #{_elementwise_call.1} parent=15 // pred_fallthru
          _
      $region16: #{_elementwise_call.1} parent=5 // pred_fallthru
        _
      %p103 = scmp.le.s32.totalorder 1, %s13
      %p104 = scmp.lt.s32.totalorder %s13, 3
      %p105 = pnand %p103, %p104
      %p106 = pneg %p105
      // Predicated region
      $region21: #{_elementwise_call.1} parent=5 // pred_check
        _
      $region22: #{_elementwise_call.1} parent=5 // pred_check_branch
        %108 = sbr.rel (%p105) target = $region24
      $region23: #{_elementwise_call.1} parent=5 // pred_region
        %s109 = ssub.s32 %s13, 1
        %s110 = sand.u32 %s26, 1
        %s111 = scalar_lea.sflag [#allocation3], %s110
        %s112 = sand.u32 %s26, 1
        %s113 = smul.addr %s112, 16
        %s114 = scalar_lea.vmem [#allocation2], %s113
        // Predicated region
        $region25: #{_elementwise_call.1} parent=23 // pred_check
          %p115 = pneg %p39
        $region26: #{_elementwise_call.1} parent=23 // pred_check_branch
          %117 = sbr.rel (%p115) target = $region28
        $region27: #{_elementwise_call.1} parent=23 // pred_region
          %118 = dma.done %s111, 256
        $region28: #{_elementwise_call.1} parent=23 // pred_fallthru
          _
        %s119 = sand.u32 %s26, 1
        %s120 = scalar_lea.sflag [#allocation3], %s119
        %s121 = sand.u32 %s26, 1
        %s122 = smul.addr %s121, 16
        %s123 = scalar_lea.vmem [#allocation2], %s122
        %p124 = pneg %p39
        %p125 = pneg %p36
        %p126 = pneg %p65
        %p127 = pneg %p62
        %s128 = sand.u32 %s52, 1
        %s129 = scalar_lea.sflag [#allocation4], %s128
        %s130 = sand.u32 %s52, 1
        %s131 = smul.addr %s130, 16
        %s132 = scalar_lea.vmem [#allocation5], %s131
        %v133 = vld [vmem:[%s114] sm:$0xff]
        %v134 = vld [vmem:[%s114 + $0x8] sm:$0xff]
        %v135 = vmul.f32 %v133, 1.442695
        %v136 = vpow.pop %v135
        %v137 = vmul.f32 %v134, 1.442695
        %v138 = vpow.pop %v137
        %139 = vst [vmem:[%s132] sm:$0xff] %v136
        %140 = vst [vmem:[%s132 + $0x8] sm:$0xff] %v138
        %s141 = sand.u32 %s52, 1
        %s142 = scalar_lea.sflag [#allocation4], %s141
        %s143 = sand.u32 %s52, 1
        %s144 = smul.addr %s143, 16
        %s145 = scalar_lea.vmem [#allocation5], %s144
        // Predicated region
        $region29: #{_elementwise_call.1} parent=23 // pred_check
          %p146 = pneg %p62
        $region30: #{_elementwise_call.1} parent=23 // pred_check_branch
          %148 = sbr.rel (%p146) target = $region32
        $region31: #{_elementwise_call.1} parent=23 // pred_region
          %s150 = ssub.s32 256, 256
          %151 = vsyncadd %s142, %s150
          %s152 = smul.addr %s18, 2
          %s153 = smul.addr %s152, 128
          %s154 = scalar_lea.hbm %s1, %s153
          %s156 = sshll.u32 %s145, 4
          %s157 = int_to_ptr.vmem [resolvable:$true] %s156
          %159 = dma.vmem_to_hbm [thread:$0]  %s157, 256, %s154, %s142
        $region32: #{_elementwise_call.1} parent=23 // pred_fallthru
          _
      $region24: #{_elementwise_call.1} parent=5 // pred_fallthru
        _
      %p160 = scmp.le.s32.totalorder 2, %s13
      // Predicated region
      $region33: #{_elementwise_call.1} parent=5 // pred_check
        %p161 = pneg %p160
      $region34: #{_elementwise_call.1} parent=5 // pred_check_branch
        %163 = sbr.rel (%p161) target = $region36
      $region35: #{_elementwise_call.1} parent=5 // pred_region
        %s164 = ssub.s32 %s13, 2
        // Predicated region
        $region37: #{_elementwise_call.1} parent=35 // pred_check
          %p165 = pneg %p68
        $region38: #{_elementwise_call.1} parent=35 // pred_check_branch
          %167 = sbr.rel (%p165) target = $region40
        $region39: #{_elementwise_call.1} parent=35 // pred_region
          %s168 = sand.u32 %s53, 1
          %s169 = scalar_lea.sflag [#allocation4], %s168
          %s170 = sand.u32 %s53, 1
          %s171 = smul.addr %s170, 16
          %s172 = scalar_lea.vmem [#allocation5], %s171
          %173 = dma.done %s169, 256
        $region40: #{_elementwise_call.1} parent=35 // pred_fallthru
          _
      $region36: #{_elementwise_call.1} parent=5 // pred_fallthru
        _
    $region6: #{_elementwise_call.1} parent=1 // loop_footer
      %s17 = sadd.s32 1, %s13
    $region7: #{_elementwise_call.1} parent=1 // loop_footer_branch
      %12 = sbr.rel target = $region3
    $region8: #{_elementwise_call.1} parent=1 // loop_exit
      _
    %174 = vsyncpa [#allocation3], 1
    %s175 = scalar_lea.sflag [#allocation3], 1
    %176 = vsyncpa %s175, 1
    %177 = vsyncpa [#allocation4], 1
    %s178 = scalar_lea.sflag [#allocation4], 1
    %179 = vsyncpa %s178, 1

</llo_original>
